<compile_context>
chip_gen: v6e
topology: v6e:2x2x1
jax: 0.10.0
libtpu: 0.0.40
codegen_flags: <defaults>
</compile_context>

<pallas_src>
import functools

import jax
import jax.numpy as jnp
from jax import lax
from jax.experimental import pallas as pl
from jax.experimental.pallas import tpu as pltpu


def _next_pow2(x: int) -> int:
    return 1 if x <= 1 else 1 << (int(x) - 1).bit_length()


def _wavenet_block_kernel(d, tl, tlh, l_real, cdt,
                          xl_ref, x_ref, xr_ref, w1_ref, w2_ref, b_ref, o_ref):
    """One (batch, L-tile) grid step.

    xl_ref: (1, TLH, C) left halo  = x rows [j*TL - TLH, j*TL)       (clamped at j==0)
    x_ref : (1, TL,  C) main tile  = x rows [j*TL, (j+1)*TL)
    xr_ref: (1, TLH, C) right halo = x rows [(j+1)*TL, (j+1)*TL+TLH) (clamped at last j)
    w1_ref: (C, 3C)     [W1_tap0 | W1_tap1 | W_res]  (input-major), compute dtype
    w2_ref: (2, C, C)   (W2_tap0, W2_tap1)           (input-major), compute dtype
    b_ref : (3, C)      rows = (b1, b2, b_res), f32
    o_ref : (1, TL, C)  output rows [j*TL, (j+1)*TL)
    """
    c = w2_ref.shape[-1]
    j = pl.program_id(1)

    w1 = w1_ref[...]
    xc = x_ref[0].astype(cdt)

    # Fused first-stage matmul on the aligned main tile: both conv1 taps and
    # the 1x1 residual conv (N-fusion costs no extra input copies).
    z = jnp.dot(xc, w1, preferred_element_type=jnp.float32)            # (TL, 3C)
    p = z[:, 0:c]              # x[t]   @ W1_tap0
    q = z[:, c:2 * c]          # x[t]   @ W1_tap1
    res = z[:, 2 * c:3 * c]    # x[t]   @ W_res

    # Tiny halo matmuls: only the tap whose receptive field leaves the tile.
    zl = jnp.dot(xl_ref[0].astype(cdt), w1[:, 0:c],
                 preferred_element_type=jnp.float32)                   # (TLH, C)
    zr = jnp.dot(xr_ref[0].astype(cdt), w1[:, c:2 * c],
                 preferred_element_type=jnp.float32)                   # (TLH, C)

    # +/-d row shifts applied to narrow (TL, C) operands (1/3 of the copy
    # traffic of shifting the fused (TL, 3C) z); the d boundary rows are
    # spliced in from the halo matmuls.
    q_up = jnp.concatenate([q[d:, :], zr[:d, :]], axis=0)              # x[t+d] @ W1_tap1
    p_dn = jnp.concatenate([zl[tlh - d:, :], p[:tl - d, :]], axis=0)   # x[t-d] @ W1_tap0

    b1 = b_ref[0:1, :]
    b2 = b_ref[1:2, :]
    br = b_ref[2:3, :]

    # conv1 is a *valid* conv: y1[s] exists only for s in [0, L-d); outside it
    # conv2 sees its own zero padding, hence the masks (these also neutralise
    # the clamped halo reads at both sequence ends).
    t = j * tl + lax.broadcasted_iota(jnp.int32, (tl, 1), 0)
    y1_t = jnp.where(t < l_real - d, jnp.maximum(p + q_up + b1, 0.0), 0.0)
    y1_tm = jnp.where(t >= d, jnp.maximum(p_dn + q + b1, 0.0), 0.0)

    # Second stage (conv2): two MXU matmuls — no (TL, 2C) lane-concat copy.
    y2 = (jnp.dot(y1_tm.astype(cdt), w2_ref[0], preferred_element_type=jnp.float32)
          + jnp.dot(y1_t.astype(cdt), w2_ref[1], preferred_element_type=jnp.float32))
    y2 = jnp.maximum(y2 + b2, 0.0)

    o_ref[0] = (y2 + res + br).astype(o_ref.dtype)


def wavenet_block_nlc(x_nlc, params, dilation, *, tl_target=1024,
                      compute_dtype=None, vmem_budget_bytes=24 * 1024 * 1024):
    """WaveNetBlock forward, channels-last activations: (N, L, C) -> (N, L, C).

    When L is a multiple of the chosen L-tile there is no host-side pad or
    output slice (zero extra HBM passes).  A stacked WaveNet should round L to
    a tile multiple once per network and call this function for every block.
    """
    N, L, C = x_nlc.shape
    d = int(dilation)
    assert 1 <= d < L, "requires 1 <= dilation < L"

    x_dt = x_nlc.dtype
    cdt = jnp.bfloat16 if compute_dtype is None else jnp.dtype(compute_dtype)

    # Minimum sublane tile for the HBM-resident activation blocks (dtype-aware).
    sub = max(8, 32 // jnp.dtype(x_dt).itemsize)
    tlh = _next_pow2(max(d, sub))                       # halo rows per step (>= d)
    tl = max(min(_next_pow2(tl_target), _next_pow2(L)), tlh)

    # Keep the per-step VMEM footprint inside a budget that fits every TPU
    # generation (v7x has only 64 MiB of physical VMEM per TensorCore).
    def step_vmem_bytes(tl_):
        act = jnp.dtype(x_dt).itemsize
        io = 2 * 2 * tl_ * C * act                  # main in + out tiles, double-buffered
        halos = 2 * 2 * 2 * tlh * C * act           # two halos, double-buffered
        inter = 10 * tl_ * C * 4                    # f32 z / shifts / y1 / y2 + slack
        wgt = 2 * 5 * C * C * jnp.dtype(cdt).itemsize + 3 * C * 4
        return io + halos + inter + wgt

    while tl > tlh and step_vmem_bytes(tl) > vmem_budget_bytes:
        tl //= 2
    # v7x megacore: keep at least two grid steps when the batch is 1.
    while tl > tlh and N * (-(-L // tl)) < 2:
        tl //= 2

    nt = -(-L // tl)                                 # number of L tiles
    l_round = nt * tl
    ratio = tl // tlh                                # halo blocks per main tile
    nblk = l_round // tlh                            # total halo-sized blocks

    w1, b1 = params["conv1"]        # (C, C, 2), (C,)
    w2, b2 = params["conv2"]        # (C, C, 2), (C,)
    wr, br = params["res_conv"]     # (C, C, 1), (C,)

    # (O, I, k) taps -> input-major (I, O) matrices, fused/stacked once.
    wcat1 = jnp.concatenate(
        [w1[:, :, 0].T, w1[:, :, 1].T, wr[:, :, 0].T], axis=1).astype(cdt)  # (C, 3C)
    w2s = jnp.stack([w2[:, :, 0].T, w2[:, :, 1].T], axis=0).astype(cdt)     # (2, C, C)
    biases = jnp.stack([b1, b2, br], axis=0).astype(jnp.float32)            # (3, C)

    # Only ragged sequence lengths pay a pad (and later a slice) pass.
    x_in = x_nlc if l_round == L else jnp.pad(
        x_nlc, ((0, 0), (0, l_round - L), (0, 0)))

    kernel = functools.partial(_wavenet_block_kernel, d, tl, tlh, L, cdt)

    out = pl.pallas_call(
        kernel,
        out_shape=jax.ShapeDtypeStruct((N, l_round, C), x_dt),
        grid_spec=pltpu.PrefetchScalarGridSpec(
            num_scalar_prefetch=0,
            grid=(N, nt),
            in_specs=[
                # left halo (clamped to block 0 at j == 0; masked in-kernel)
                pl.BlockSpec((1, tlh, C),
                             lambda n, j: (n, jnp.maximum(j * ratio - 1, 0), 0)),
                # main tile
                pl.BlockSpec((1, tl, C), lambda n, j: (n, j, 0)),
                # right halo (clamped to the last block at j == nt-1; masked)
                pl.BlockSpec((1, tlh, C),
                             lambda n, j: (n, jnp.minimum((j + 1) * ratio, nblk - 1), 0)),
                pl.BlockSpec((C, 3 * C), lambda n, j: (0, 0)),        # fused W1 | Wres
                pl.BlockSpec((2, C, C), lambda n, j: (0, 0, 0)),      # W2 taps
                pl.BlockSpec((3, C), lambda n, j: (0, 0)),            # biases
            ],
            out_specs=pl.BlockSpec((1, tl, C), lambda n, j: (n, j, 0)),
        ),
        compiler_params=pltpu.CompilerParams(
            dimension_semantics=("parallel", "parallel"),
            vmem_limit_bytes=32 * 1024 * 1024,
        ),
    )(x_in, x_in, x_in, wcat1, w2s, biases)

    return out if l_round == L else out[:, :L, :]


def wavenet_block(x_ncl, params, dilation, **kwargs):
    """PyTorch-layout wrapper: (N, C, L) -> (N, C, L).

    A stacked WaveNet should call `wavenet_block_nlc` directly and stay
    channels-last so these two transposes are paid once per network.
    """
    out = wavenet_block_nlc(jnp.transpose(x_ncl, (0, 2, 1)), params, dilation, **kwargs)
    return jnp.transpose(out, (0, 2, 1))


# ----------------------------- pure-JAX reference -----------------------------
def _conv1d_ref(x, w, b, dilation, padding):
    out = lax.conv_general_dilated(
        x, w, window_strides=(1,), padding=[(padding, padding)],
        rhs_dilation=(dilation,), dimension_numbers=("NCH", "OIH", "NCH"))
    return out + b[None, :, None]


def wavenet_block_ref(x, params, dilation):
    w1, b1 = params["conv1"]
    w2, b2 = params["conv2"]
    wr, br = params["res_conv"]
    pad1 = (1 + dilation - 2) ^ (dilation - 1)      # Python XOR precedence -> 0
    out = jax.nn.relu(_conv1d_ref(x, w1, b1, dilation, pad1))
    out = jax.nn.relu(_conv1d_ref(out, w2, b2, dilation, dilation))
    res = _conv1d_ref(x, wr, br, 1, 0)
    return out + res


def _make_params(key, C, scale=0.5):
    ks = jax.random.split(key, 6)
    return {
        "conv1": (scale * jax.random.normal(ks[0], (C, C, 2), jnp.float32),
                  scale * jax.random.normal(ks[1], (C,), jnp.float32)),
        "conv2": (scale * jax.random.normal(ks[2], (C, C, 2), jnp.float32),
                  scale * jax.random.normal(ks[3], (C,), jnp.float32)),
        "res_conv": (scale * jax.random.normal(ks[4], (C, C, 1), jnp.float32),
                     scale * jax.random.normal(ks[5], (C,), jnp.float32)),
    }


# ------------------------------------ main -------------------------------------
if __name__ == "__main__":
    root = jax.random.PRNGKey(0)

    # ---- test 1: the module's toy shape, exact f32 compute, no pad/slice ----
    k_p, k_x, root = jax.random.split(root, 3)
    N, C, L, d = 2, 4, 16, 2
    params = _make_params(k_p, C)
    x = jax.random.normal(k_x, (N, C, L), jnp.float32)
    out = jax.block_until_ready(wavenet_block(x, params, d, compute_dtype=jnp.float32))
    ref = wavenet_block_ref(x, params, d)
    assert out.shape == (N, C, L)
    assert jnp.allclose(out, ref, atol=1e-4, rtol=1e-4), "f32 mismatch (toy shape)"

    # ---- test 2: multiple L tiles, halos crossing tiles, ragged last tile ----
    k_p, k_x, root = jax.random.split(root, 3)
    N2, C2, L2, d2 = 2, 8, 72, 4
    params2 = _make_params(k_p, C2)
    x2 = jax.random.normal(k_x, (N2, C2, L2), jnp.float32)
    out2 = jax.block_until_ready(
        wavenet_block(x2, params2, d2, tl_target=16, compute_dtype=jnp.float32))
    ref2 = wavenet_block_ref(x2, params2, d2)
    assert out2.shape == (N2, C2, L2)
    assert jnp.allclose(out2, ref2, atol=1e-4, rtol=1e-4), "f32 mismatch (tiled)"

    # ---- test 3: default bf16 MXU compute path (f32 accumulation) ----
    out3 = jax.block_until_ready(wavenet_block(x2, params2, d2, tl_target=16))
    rel = jnp.linalg.norm(out3 - ref2) / jnp.linalg.norm(ref2)
    assert rel < 2e-2, f"bf16 relative error too large: {rel}"

    # ---- test 4: tile-aligned L (no pad / no slice) + N=1 megacore split ----
    k_p, k_x, root = jax.random.split(root, 3)
    N4, C4, L4, d4 = 1, 128, 256, 8
    params4 = _make_params(k_p, C4, scale=0.1)
    x4 = jax.random.normal(k_x, (N4, C4, L4), jnp.float32)
    out4 = jax.block_until_ready(wavenet_block(x4, params4, d4))
    ref4 = wavenet_block_ref(x4, params4, d4)
    rel4 = jnp.linalg.norm(out4 - ref4) / jnp.linalg.norm(ref4)
    assert out4.shape == (N4, C4, L4)
    assert rel4 < 2.5e-2, f"bf16 relative error too large (aligned tile): {rel4}"

    print("KERNEL_OK")
</pallas_src>

<mosaic_0001>
module attributes {stable_mosaic.version = 11 : i64} {
  func.func @_wavenet_block_kernel(%arg0: i32, %arg1: i32, %arg2: memref<1x8x4xf32, #tpu.memory_space<vmem>>, %arg3: memref<1x16x4xf32, #tpu.memory_space<vmem>>, %arg4: memref<1x8x4xf32, #tpu.memory_space<vmem>>, %arg5: memref<4x12xf32, #tpu.memory_space<vmem>>, %arg6: memref<2x4x4xf32, #tpu.memory_space<vmem>>, %arg7: memref<3x4xf32, #tpu.memory_space<vmem>>, %arg8: memref<1x16x4xf32, #tpu.memory_space<vmem>>) attributes {dimension_semantics = [#tpu.dimension_semantics<parallel>, #tpu.dimension_semantics<parallel>], iteration_bounds = array<i64: 2, 1>, scalar_prefetch = 0 : i64, scratch_operands = 0 : i64, tpu.core_type = #tpu.core_type<tc>, window_params = [{transform_indices = @transform_0, window_bounds = array<i64: 1, 8, 4>}, {transform_indices = @transform_1, window_bounds = array<i64: 1, 16, 4>}, {transform_indices = @transform_2, window_bounds = array<i64: 1, 8, 4>}, {pipeline_mode = #tpu.pipeline_mode<synchronous>, transform_indices = @transform_3, window_bounds = array<i64: 4, 12>}, {pipeline_mode = #tpu.pipeline_mode<synchronous>, transform_indices = @transform_4, window_bounds = array<i64: 2, 4, 4>}, {pipeline_mode = #tpu.pipeline_mode<synchronous>, transform_indices = @transform_5, window_bounds = array<i64: 3, 4>}, {transform_indices = @transform_6, window_bounds = array<i64: 1, 16, 4>}]} {
    %c0 = arith.constant 0 : index
    %c0_0 = arith.constant 0 : index
    %0 = vector.load %arg5[%c0, %c0_0] : memref<4x12xf32, #tpu.memory_space<vmem>>, vector<4x12xf32>
    %c0_1 = arith.constant 0 : index
    %c0_2 = arith.constant 0 : index
    %c0_3 = arith.constant 0 : index
    %1 = vector.load %arg3[%c0_1, %c0_2, %c0_3] : memref<1x16x4xf32, #tpu.memory_space<vmem>>, vector<1x16x4xf32>
    %2 = vector.shape_cast %1 : vector<1x16x4xf32> to vector<16x4xf32>
    %cst = arith.constant dense<0.000000e+00> : vector<16x12xf32>
    %3 = tpu.matmul %2, %0, %cst {dimension_numbers = #tpu.dot_dimension_numbers<[1], [0], [0], [1], [0, 0, 1, 1], [], []>} : vector<16x4xf32>, vector<4x12xf32>, vector<16x12xf32> -> vector<16x12xf32>
    %4 = vector.extract_strided_slice %3 {offsets = [0, 0], sizes = [16, 4], strides = [1, 1]} : vector<16x12xf32> to vector<16x4xf32>
    %5 = vector.extract_strided_slice %3 {offsets = [0, 4], sizes = [16, 4], strides = [1, 1]} : vector<16x12xf32> to vector<16x4xf32>
    %6 = vector.extract_strided_slice %3 {offsets = [0, 8], sizes = [16, 4], strides = [1, 1]} : vector<16x12xf32> to vector<16x4xf32>
    %c0_4 = arith.constant 0 : index
    %c0_5 = arith.constant 0 : index
    %c0_6 = arith.constant 0 : index
    %7 = vector.load %arg2[%c0_4, %c0_5, %c0_6] : memref<1x8x4xf32, #tpu.memory_space<vmem>>, vector<1x8x4xf32>
    %8 = vector.shape_cast %7 : vector<1x8x4xf32> to vector<8x4xf32>
    %9 = vector.extract_strided_slice %0 {offsets = [0, 0], sizes = [4, 4], strides = [1, 1]} : vector<4x12xf32> to vector<4x4xf32>
    %cst_7 = arith.constant dense<0.000000e+00> : vector<8x4xf32>
    %10 = tpu.matmul %8, %9, %cst_7 {dimension_numbers = #tpu.dot_dimension_numbers<[1], [0], [0], [1], [0, 0, 1, 1], [], []>} : vector<8x4xf32>, vector<4x4xf32>, vector<8x4xf32> -> vector<8x4xf32>
    %c0_8 = arith.constant 0 : index
    %c0_9 = arith.constant 0 : index
    %c0_10 = arith.constant 0 : index
    %11 = vector.load %arg4[%c0_8, %c0_9, %c0_10] : memref<1x8x4xf32, #tpu.memory_space<vmem>>, vector<1x8x4xf32>
    %12 = vector.shape_cast %11 : vector<1x8x4xf32> to vector<8x4xf32>
    %13 = vector.extract_strided_slice %0 {offsets = [0, 4], sizes = [4, 4], strides = [1, 1]} : vector<4x12xf32> to vector<4x4xf32>
    %cst_11 = arith.constant dense<0.000000e+00> : vector<8x4xf32>
    %14 = tpu.matmul %12, %13, %cst_11 {dimension_numbers = #tpu.dot_dimension_numbers<[1], [0], [0], [1], [0, 0, 1, 1], [], []>} : vector<8x4xf32>, vector<4x4xf32>, vector<8x4xf32> -> vector<8x4xf32>
    %15 = vector.extract_strided_slice %5 {offsets = [2, 0], sizes = [14, 4], strides = [1, 1]} : vector<16x4xf32> to vector<14x4xf32>
    %16 = vector.extract_strided_slice %14 {offsets = [0, 0], sizes = [2, 4], strides = [1, 1]} : vector<8x4xf32> to vector<2x4xf32>
    %17 = tpu.concatenate %15, %16 in 0 : vector<14x4xf32>, vector<2x4xf32> -> vector<16x4xf32>
    %18 = vector.extract_strided_slice %10 {offsets = [6, 0], sizes = [2, 4], strides = [1, 1]} : vector<8x4xf32> to vector<2x4xf32>
    %19 = vector.extract_strided_slice %4 {offsets = [0, 0], sizes = [14, 4], strides = [1, 1]} : vector<16x4xf32> to vector<14x4xf32>
    %20 = tpu.concatenate %18, %19 in 0 : vector<2x4xf32>, vector<14x4xf32> -> vector<16x4xf32>
    %c0_12 = arith.constant 0 : index
    %c0_13 = arith.constant 0 : index
    %21 = vector.load %arg7[%c0_12, %c0_13] : memref<3x4xf32, #tpu.memory_space<vmem>>, vector<1x4xf32>
    %c1 = arith.constant 1 : index
    %c0_14 = arith.constant 0 : index
    %22 = vector.load %arg7[%c1, %c0_14] : memref<3x4xf32, #tpu.memory_space<vmem>>, vector<1x4xf32>
    %c2 = arith.constant 2 : index
    %c0_15 = arith.constant 0 : index
    %23 = vector.load %arg7[%c2, %c0_15] : memref<3x4xf32, #tpu.memory_space<vmem>>, vector<1x4xf32>
    %c16_i32 = arith.constant 16 : i32
    %24 = arith.muli %arg1, %c16_i32 : i32
    %25 = tpu.iota {dimensions = array<i32: 0>} : vector<16x1xi32>
    %26 = vector.broadcast %24 : i32 to vector<16x1xi32>
    %27 = arith.addi %26, %25 : vector<16x1xi32>
    %c14_i32 = arith.constant 14 : i32
    %28 = vector.broadcast %c14_i32 : i32 to vector<16x1xi32>
    %29 = arith.cmpi slt, %27, %28 : vector<16x1xi32>
    %30 = arith.addf %4, %17 : vector<16x4xf32>
    %31 = vector.broadcast %21 : vector<1x4xf32> to vector<16x4xf32>
    %32 = arith.addf %30, %31 : vector<16x4xf32>
    %cst_16 = arith.constant 0.000000e+00 : f32
    %33 = vector.broadcast %cst_16 : f32 to vector<16x4xf32>
    %34 = arith.maximumf %32, %33 : vector<16x4xf32>
    %cst_17 = arith.constant 0.000000e+00 : f32
    %35 = vector.shape_cast %29 : vector<16x1xi1> to vector<16x1xi1>
    %36 = vector.broadcast %35 : vector<16x1xi1> to vector<16x4xi1>
    %37 = vector.broadcast %cst_17 : f32 to vector<16x4xf32>
    %38 = arith.select %36, %34, %37 : vector<16x4xi1>, vector<16x4xf32>
    %c2_i32 = arith.constant 2 : i32
    %39 = vector.broadcast %c2_i32 : i32 to vector<16x1xi32>
    %40 = arith.cmpi sge, %27, %39 : vector<16x1xi32>
    %41 = arith.addf %20, %5 : vector<16x4xf32>
    %42 = vector.broadcast %21 : vector<1x4xf32> to vector<16x4xf32>
    %43 = arith.addf %41, %42 : vector<16x4xf32>
    %cst_18 = arith.constant 0.000000e+00 : f32
    %44 = vector.broadcast %cst_18 : f32 to vector<16x4xf32>
    %45 = arith.maximumf %43, %44 : vector<16x4xf32>
    %cst_19 = arith.constant 0.000000e+00 : f32
    %46 = vector.shape_cast %40 : vector<16x1xi1> to vector<16x1xi1>
    %47 = vector.broadcast %46 : vector<16x1xi1> to vector<16x4xi1>
    %48 = vector.broadcast %cst_19 : f32 to vector<16x4xf32>
    %49 = arith.select %47, %45, %48 : vector<16x4xi1>, vector<16x4xf32>
    %c0_20 = arith.constant 0 : index
    %c0_21 = arith.constant 0 : index
    %c0_22 = arith.constant 0 : index
    %50 = vector.load %arg6[%c0_20, %c0_21, %c0_22] : memref<2x4x4xf32, #tpu.memory_space<vmem>>, vector<1x4x4xf32>
    %51 = vector.shape_cast %50 : vector<1x4x4xf32> to vector<4x4xf32>
    %cst_23 = arith.constant dense<0.000000e+00> : vector<16x4xf32>
    %52 = tpu.matmul %49, %51, %cst_23 {dimension_numbers = #tpu.dot_dimension_numbers<[1], [0], [0], [1], [0, 0, 1, 1], [], []>} : vector<16x4xf32>, vector<4x4xf32>, vector<16x4xf32> -> vector<16x4xf32>
    %c1_24 = arith.constant 1 : index
    %c0_25 = arith.constant 0 : index
    %c0_26 = arith.constant 0 : index
    %53 = vector.load %arg6[%c1_24, %c0_25, %c0_26] : memref<2x4x4xf32, #tpu.memory_space<vmem>>, vector<1x4x4xf32>
    %54 = vector.shape_cast %53 : vector<1x4x4xf32> to vector<4x4xf32>
    %cst_27 = arith.constant dense<0.000000e+00> : vector<16x4xf32>
    %55 = tpu.matmul %38, %54, %cst_27 {dimension_numbers = #tpu.dot_dimension_numbers<[1], [0], [0], [1], [0, 0, 1, 1], [], []>} : vector<16x4xf32>, vector<4x4xf32>, vector<16x4xf32> -> vector<16x4xf32>
    %56 = arith.addf %52, %55 : vector<16x4xf32>
    %57 = vector.broadcast %22 : vector<1x4xf32> to vector<16x4xf32>
    %58 = arith.addf %56, %57 : vector<16x4xf32>
    %cst_28 = arith.constant 0.000000e+00 : f32
    %59 = vector.broadcast %cst_28 : f32 to vector<16x4xf32>
    %60 = arith.maximumf %58, %59 : vector<16x4xf32>
    %61 = arith.addf %60, %6 : vector<16x4xf32>
    %62 = vector.broadcast %23 : vector<1x4xf32> to vector<16x4xf32>
    %63 = arith.addf %61, %62 : vector<16x4xf32>
    %c0_29 = arith.constant 0 : index
    %c0_30 = arith.constant 0 : index
    %c0_31 = arith.constant 0 : index
    %64 = vector.load %arg8[%c0_29, %c0_30, %c0_31] : memref<1x16x4xf32, #tpu.memory_space<vmem>>, vector<1x16x4xf32>
    %65 = vector.shape_cast %64 : vector<1x16x4xf32> to vector<16x4xf32>
    %66 = vector.shape_cast %63 : vector<16x4xf32> to vector<1x16x4xf32>
    tpu.vector_store %arg8[%c0_29, %c0_30, %c0_31], %66 {strides = array<i32>} : memref<1x16x4xf32, #tpu.memory_space<vmem>>, vector<1x16x4xf32>,
    return
  }
  func.func @transform_0(%arg0: i32, %arg1: i32) -> (i32, i32, i32) {
    %c2_i32 = arith.constant 2 : i32
    %0 = arith.muli %arg1, %c2_i32 : i32
    %c1_i32 = arith.constant 1 : i32
    %1 = arith.subi %0, %c1_i32 : i32
    %c0_i32 = arith.constant 0 : i32
    %2 = arith.maxsi %1, %c0_i32 : i32
    %c0_i32_0 = arith.constant 0 : i32
    %c0_i32_1 = arith.constant 0 : i32
    return %arg0, %2, %c0_i32_0 : i32, i32, i32
  }
  func.func @transform_1(%arg0: i32, %arg1: i32) -> (i32, i32, i32) {
    %c0_i32 = arith.constant 0 : i32
    %c0_i32_0 = arith.constant 0 : i32
    return %arg0, %arg1, %c0_i32 : i32, i32, i32
  }
  func.func @transform_2(%arg0: i32, %arg1: i32) -> (i32, i32, i32) {
    %c1_i32 = arith.constant 1 : i32
    %0 = arith.addi %arg1, %c1_i32 : i32
    %c2_i32 = arith.constant 2 : i32
    %1 = arith.muli %0, %c2_i32 : i32
    %c1_i32_0 = arith.constant 1 : i32
    %2 = arith.minsi %1, %c1_i32_0 : i32
    %c0_i32 = arith.constant 0 : i32
    %c0_i32_1 = arith.constant 0 : i32
    return %arg0, %2, %c0_i32 : i32, i32, i32
  }
  func.func @transform_3(%arg0: i32, %arg1: i32) -> (i32, i32) {
    %c0_i32 = arith.constant 0 : i32
    %c0_i32_0 = arith.constant 0 : i32
    %c0_i32_1 = arith.constant 0 : i32
    return %c0_i32, %c0_i32_0 : i32, i32
  }
  func.func @transform_4(%arg0: i32, %arg1: i32) -> (i32, i32, i32) {
    %c0_i32 = arith.constant 0 : i32
    %c0_i32_0 = arith.constant 0 : i32
    %c0_i32_1 = arith.constant 0 : i32
    %c0_i32_2 = arith.constant 0 : i32
    return %c0_i32, %c0_i32_0, %c0_i32_1 : i32, i32, i32
  }
  func.func @transform_5(%arg0: i32, %arg1: i32) -> (i32, i32) {
    %c0_i32 = arith.constant 0 : i32
    %c0_i32_0 = arith.constant 0 : i32
    %c0_i32_1 = arith.constant 0 : i32
    return %c0_i32, %c0_i32_0 : i32, i32
  }
  func.func @transform_6(%arg0: i32, %arg1: i32) -> (i32, i32, i32) {
    %c0_i32 = arith.constant 0 : i32
    %c0_i32_0 = arith.constant 0 : i32
    return %arg0, %arg1, %c0_i32 : i32, i32, i32
  }
}

</mosaic_0001>

<llo_original>
// kernel: tpu_custom_call.1
$region0: #{tpu_custom_call.1}
  #allocation0 [shape = 'u32[]', space=smem, size = 0x4, offset = 0x4, fixed_abs, tag = 'smem constant byte address 0x4 - core index']
  #allocation1 [shape = 'u32[144,128]{1,0:T(1,128)}', space=vmem, size = 0x12000, scoped, tag = 'internal scratch']
  %s0 = inlined_call_operand.vmem [shape: f32[2,16,4], index: 0, kind: input, shape index: {}]
  %s1 = inlined_call_operand.vmem [shape: f32[2,16,4], index: 1, kind: input, shape index: {}]
  %s2 = inlined_call_operand.vmem [shape: f32[2,16,4], index: 2, kind: input, shape index: {}]
  %s3 = inlined_call_operand.vmem [shape: f32[4,12], index: 3, kind: input, shape index: {}]
  %s4 = inlined_call_operand.vmem [shape: f32[2,4,4], index: 4, kind: input, shape index: {}]
  %s5 = inlined_call_operand.vmem [shape: f32[3,4], index: 5, kind: input, shape index: {}]
  %s6 = inlined_call_operand.vmem [shape: f32[2,16,4], index: 6, kind: output, shape index: {}]
  %s7 = sld [smem:[#allocation0]]
  $region57: #{tpu_custom_call.1} parent=0
    _
  %s9 = ssub.s32 1, %s7
  %s10 = scalar_select 0, %s9, %s7
  loop: start=0, step=1, limit=4
  $region2: #{tpu_custom_call.1} parent=0 // loop_pre_header
    _
  $region3: #{tpu_custom_call.1} parent=0 // loop_header
    %s12 = sphi 0, %s16
    %p13 = scmp.ge.s32.totalorder %s12, 4
    %s19 = sphi 0, %s31
    %s20 = sphi 0, %s27
    %s21 = sphi 0, %s19
    %s22 = sphi 0, %s20
    %s23 = sphi 0, %s21
    %s24 = sphi 0, %s22
    %s44 = sphi 0, %s46
    %s47 = sphi 0, %s44
    %s48 = sphi 0, %s47
    %s64 = sphi 0, %s48
    %s72 = sphi 0, %s74
    %s75 = sphi 0, %s72
    %s76 = sphi 0, %s75
    %s92 = sphi 0, %s76
    %s108 = sphi 0, %s110
    %s111 = sphi 0, %s108
    %s112 = sphi 0, %s111
    %s128 = sphi 0, %s112
    %s132 = sphi 0, %s132
    %s134 = sphi 0, %s132
    %s135 = sphi 0, %s134
    %s149 = sphi 0, %s135
    %s153 = sphi 0, %s153
    %s155 = sphi 0, %s153
    %s156 = sphi 0, %s155
    %s170 = sphi 0, %s156
    %s174 = sphi 0, %s174
    %s176 = sphi 0, %s174
    %s177 = sphi 0, %s176
    %s191 = sphi 0, %s177
    %s199 = sphi 0, %s201
    %s202 = sphi 0, %s199
    %s203 = sphi 0, %s202
    %s219 = sphi 0, %s203
  $region4: #{tpu_custom_call.1} parent=0 // loop_header_branch
    %15 = sbr.rel (%p13) target = $region8
  $region5: #{tpu_custom_call.1} parent=0 // loop_body
    %s17 = ssub.s32 %s12, 1
    %s18 = ssub.s32 %s12, 2
    %s25 = sadd.s32 1, %s20
    %p26 = scmp.ge.s32.totalorder %s25, 1
    %s27 = scalar_select %p26, 0, %s25
    %s28 = sadd.s32 1, %s19
    %s29 = scalar_select %p26, %s28, %s19
    %p30 = scmp.ge.s32.totalorder %s29, 2
    %s31 = scalar_select %p30, 0, %s29
    %s32 = smul.u32 %s20, 2
    %s33 = ssub.s32 %s32, 1
    %p34 = scmp.gt.s32.totalorder %s33, 0
    %s35 = scalar_select %p34, %s33, 0
    %s36 = smul.u32 %s27, 2
    %s37 = ssub.s32 %s36, 1
    %p38 = scmp.gt.s32.totalorder %s37, 0
    %s39 = scalar_select %p38, %s37, 0
    %s40 = ssub.s32 %s19, %s31
    %s41 = ssub.s32 %s35, %s39
    %s42 = sor.u32 %s40, %s41
    %p43 = scmp.eq.s32.totalorder %s42, 0
    %s45 = sadd.s32 %s44, 1
    %s46 = scalar_select %p43, %s44, %s45
    %p49 = pneg %p43
    %p50 = scmp.eq.s32.totalorder %s12, 1
    %p51 = por %p49, %p50
    %p52 = scmp.ne.s32.totalorder %s44, %s47
    %p53 = scmp.eq.s32.totalorder %s12, 0
    %p54 = por %p52, %p53
    %p55 = scmp.ne.s32.totalorder %s44, %s47
    %p56 = scmp.eq.s32.totalorder %s17, 1
    %p57 = por %p55, %p56
    %p58 = scmp.ne.s32.totalorder %s47, %s48
    %p59 = scmp.eq.s32.totalorder %s17, 0
    %p60 = por %p58, %p59
    %p61 = scmp.ne.s32.totalorder %s47, %s48
    %p62 = scmp.eq.s32.totalorder %s18, 1
    %p63 = por %p61, %p62
    %p65 = scmp.ne.s32.totalorder %s48, %s64
    %p66 = scmp.eq.s32.totalorder %s18, 0
    %p67 = por %p65, %p66
    %s68 = ssub.s32 %s19, %s31
    %s69 = ssub.s32 %s20, %s27
    %s70 = sor.u32 %s68, %s69
    %p71 = scmp.eq.s32.totalorder %s70, 0
    %s73 = sadd.s32 %s72, 1
    %s74 = scalar_select %p71, %s72, %s73
    %p77 = pneg %p71
    %p78 = scmp.eq.s32.totalorder %s12, 1
    %p79 = por %p77, %p78
    %p80 = scmp.ne.s32.totalorder %s72, %s75
    %p81 = scmp.eq.s32.totalorder %s12, 0
    %p82 = por %p80, %p81
    %p83 = scmp.ne.s32.totalorder %s72, %s75
    %p84 = scmp.eq.s32.totalorder %s17, 1
    %p85 = por %p83, %p84
    %p86 = scmp.ne.s32.totalorder %s75, %s76
    %p87 = scmp.eq.s32.totalorder %s17, 0
    %p88 = por %p86, %p87
    %p89 = scmp.ne.s32.totalorder %s75, %s76
    %p90 = scmp.eq.s32.totalorder %s18, 1
    %p91 = por %p89, %p90
    %p93 = scmp.ne.s32.totalorder %s76, %s92
    %p94 = scmp.eq.s32.totalorder %s18, 0
    %p95 = por %p93, %p94
    %s96 = sadd.s32 %s20, 1
    %s97 = smul.u32 %s96, 2
    %p98 = scmp.lt.s32.totalorder %s97, 1
    %s99 = scalar_select %p98, %s97, 1
    %s100 = sadd.s32 %s27, 1
    %s101 = smul.u32 %s100, 2
    %p102 = scmp.lt.s32.totalorder %s101, 1
    %s103 = scalar_select %p102, %s101, 1
    %s104 = ssub.s32 %s19, %s31
    %s105 = ssub.s32 %s99, %s103
    %s106 = sor.u32 %s104, %s105
    %p107 = scmp.eq.s32.totalorder %s106, 0
    %s109 = sadd.s32 %s108, 1
    %s110 = scalar_select %p107, %s108, %s109
    %p113 = pneg %p107
    %p114 = scmp.eq.s32.totalorder %s12, 1
    %p115 = por %p113, %p114
    %p116 = scmp.ne.s32.totalorder %s108, %s111
    %p117 = scmp.eq.s32.totalorder %s12, 0
    %p118 = por %p116, %p117
    %p119 = scmp.ne.s32.totalorder %s108, %s111
    %p120 = scmp.eq.s32.totalorder %s17, 1
    %p121 = por %p119, %p120
    %p122 = scmp.ne.s32.totalorder %s111, %s112
    %p123 = scmp.eq.s32.totalorder %s17, 0
    %p124 = por %p122, %p123
    %p125 = scmp.ne.s32.totalorder %s111, %s112
    %p126 = scmp.eq.s32.totalorder %s18, 1
    %p127 = por %p125, %p126
    %p129 = scmp.ne.s32.totalorder %s112, %s128
    %p130 = scmp.eq.s32.totalorder %s18, 0
    %p131 = por %p129, %p130
    %s133 = sadd.s32 %s132, 1
    %p136 = scmp.eq.s32.totalorder %s12, 1
    %p137 = scmp.ne.s32.totalorder %s132, %s134
    %p138 = scmp.eq.s32.totalorder %s12, 0
    %p139 = por %p137, %p138
    %p140 = scmp.ne.s32.totalorder %s132, %s134
    %p141 = scmp.eq.s32.totalorder %s17, 1
    %p142 = por %p140, %p141
    %p143 = scmp.ne.s32.totalorder %s134, %s135
    %p144 = scmp.eq.s32.totalorder %s17, 0
    %p145 = por %p143, %p144
    %p146 = scmp.ne.s32.totalorder %s134, %s135
    %p147 = scmp.eq.s32.totalorder %s18, 1
    %p148 = por %p146, %p147
    %p150 = scmp.ne.s32.totalorder %s135, %s149
    %p151 = scmp.eq.s32.totalorder %s18, 0
    %p152 = por %p150, %p151
    %s154 = sadd.s32 %s153, 1
    %p157 = scmp.eq.s32.totalorder %s12, 1
    %p158 = scmp.ne.s32.totalorder %s153, %s155
    %p159 = scmp.eq.s32.totalorder %s12, 0
    %p160 = por %p158, %p159
    %p161 = scmp.ne.s32.totalorder %s153, %s155
    %p162 = scmp.eq.s32.totalorder %s17, 1
    %p163 = por %p161, %p162
    %p164 = scmp.ne.s32.totalorder %s155, %s156
    %p165 = scmp.eq.s32.totalorder %s17, 0
    %p166 = por %p164, %p165
    %p167 = scmp.ne.s32.totalorder %s155, %s156
    %p168 = scmp.eq.s32.totalorder %s18, 1
    %p169 = por %p167, %p168
    %p171 = scmp.ne.s32.totalorder %s156, %s170
    %p172 = scmp.eq.s32.totalorder %s18, 0
    %p173 = por %p171, %p172
    %s175 = sadd.s32 %s174, 1
    %p178 = scmp.eq.s32.totalorder %s12, 1
    %p179 = scmp.ne.s32.totalorder %s174, %s176
    %p180 = scmp.eq.s32.totalorder %s12, 0
    %p181 = por %p179, %p180
    %p182 = scmp.ne.s32.totalorder %s174, %s176
    %p183 = scmp.eq.s32.totalorder %s17, 1
    %p184 = por %p182, %p183
    %p185 = scmp.ne.s32.totalorder %s176, %s177
    %p186 = scmp.eq.s32.totalorder %s17, 0
    %p187 = por %p185, %p186
    %p188 = scmp.ne.s32.totalorder %s176, %s177
    %p189 = scmp.eq.s32.totalorder %s18, 1
    %p190 = por %p188, %p189
    %p192 = scmp.ne.s32.totalorder %s177, %s191
    %p193 = scmp.eq.s32.totalorder %s18, 0
    %p194 = por %p192, %p193
    %s195 = ssub.s32 %s19, %s31
    %s196 = ssub.s32 %s20, %s27
    %s197 = sor.u32 %s195, %s196
    %p198 = scmp.eq.s32.totalorder %s197, 0
    %s200 = sadd.s32 %s199, 1
    %s201 = scalar_select %p198, %s199, %s200
    %p204 = pneg %p198
    %p205 = scmp.eq.s32.totalorder %s12, 1
    %p206 = por %p204, %p205
    %p207 = scmp.ne.s32.totalorder %s199, %s202
    %p208 = scmp.eq.s32.totalorder %s12, 0
    %p209 = por %p207, %p208
    %p210 = scmp.ne.s32.totalorder %s199, %s202
    %p211 = scmp.eq.s32.totalorder %s17, 1
    %p212 = por %p210, %p211
    %p213 = scmp.ne.s32.totalorder %s202, %s203
    %p214 = scmp.eq.s32.totalorder %s17, 0
    %p215 = por %p213, %p214
    %p216 = scmp.ne.s32.totalorder %s202, %s203
    %p217 = scmp.eq.s32.totalorder %s18, 1
    %p218 = por %p216, %p217
    %p220 = scmp.ne.s32.totalorder %s203, %s219
    %p221 = scmp.eq.s32.totalorder %s18, 0
    %p222 = por %p220, %p221
    %p223 = scmp.le.s32.totalorder 1, %s12
    %p224 = scmp.lt.s32.totalorder %s12, 3
    %p225 = pnand %p223, %p224
    %p226 = pneg %p225
    // Predicated region
    $region9: #{tpu_custom_call.1} parent=5 // pred_check
      _
    $region10: #{tpu_custom_call.1} parent=5 // pred_check_branch
      %228 = sbr.rel (%p225) target = $region12
    $region11: #{tpu_custom_call.1} parent=5 // pred_region
      %s229 = ssub.s32 %s12, 1
      // Predicated region
      $region13: #{tpu_custom_call.1} parent=11 // pred_check
        %p230 = pneg %p145
      $region14: #{tpu_custom_call.1} parent=11 // pred_check_branch
        %232 = sbr.rel (%p230) target = $region16
      $region15: #{tpu_custom_call.1} parent=11 // pred_region
        _
      $region16: #{tpu_custom_call.1} parent=11 // pred_fallthru
        _
      // Predicated region
      $region17: #{tpu_custom_call.1} parent=11 // pred_check
        %p233 = pneg %p166
      $region18: #{tpu_custom_call.1} parent=11 // pred_check_branch
        %235 = sbr.rel (%p233) target = $region20
      $region19: #{tpu_custom_call.1} parent=11 // pred_region
        _
      $region20: #{tpu_custom_call.1} parent=11 // pred_fallthru
        _
      // Predicated region
      $region21: #{tpu_custom_call.1} parent=11 // pred_check
        %p236 = pneg %p187
      $region22: #{tpu_custom_call.1} parent=11 // pred_check_branch
        %238 = sbr.rel (%p236) target = $region24
      $region23: #{tpu_custom_call.1} parent=11 // pred_region
        _
      $region24: #{tpu_custom_call.1} parent=11 // pred_fallthru
        _
    $region12: #{tpu_custom_call.1} parent=5 // pred_fallthru
      _
    %p239 = scmp.lt.s32.totalorder %s12, 2
    // Predicated region
    $region25: #{tpu_custom_call.1} parent=5 // pred_check
      %p240 = pneg %p239
    $region26: #{tpu_custom_call.1} parent=5 // pred_check_branch
      %242 = sbr.rel (%p240) target = $region28
    $region27: #{tpu_custom_call.1} parent=5 // pred_region
      // Predicated region
      $region29: #{tpu_custom_call.1} parent=27 // pred_check
        %p243 = pneg %p54
      $region30: #{tpu_custom_call.1} parent=27 // pred_check_branch
        %245 = sbr.rel (%p243) target = $region32
      $region31: #{tpu_custom_call.1} parent=27 // pred_region
        %s246 = smul.u32 %s20, 2
        %s247 = ssub.s32 %s246, 1
        %p248 = scmp.gt.s32.totalorder %s247, 0
        %s249 = scalar_select %p248, %s247, 0
        %p250 = scmp.lt.s32.totalorder %s19, 1
        %s251 = scalar_select %p250, %s19, 1
        %p252 = scmp.lt.s32.totalorder %s249, 1
        %s253 = scalar_select %p252, %s249, 1
        %s254 = smul.addr %s251, 2
        %s255 = sadd.s32 %s253, %s254
        %s256 = smul.addr %s255, 8
        %s257 = scalar_lea.vmem %s0, %s256
        %s258 = smul.u32 %s20, 2
        %s259 = ssub.s32 %s258, 1
        %p260 = scmp.gt.s32.totalorder %s259, 0
        %s261 = scalar_select %p260, %s259, 0
      $region32: #{tpu_custom_call.1} parent=27 // pred_fallthru
        _
      // Predicated region
      $region33: #{tpu_custom_call.1} parent=27 // pred_check
        %p262 = pneg %p82
      $region34: #{tpu_custom_call.1} parent=27 // pred_check_branch
        %264 = sbr.rel (%p262) target = $region36
      $region35: #{tpu_custom_call.1} parent=27 // pred_region
        %s265 = smul.u32 2, %s20
        %p266 = scmp.lt.s32.totalorder %s19, 1
        %s267 = scalar_select %p266, %s19, 1
        %p268 = scmp.lt.s32.totalorder %s265, 1
        %s269 = scalar_select %p268, %s265, 1
        %s270 = smul.addr %s267, 2
        %s271 = sadd.s32 %s269, %s270
        %s272 = smul.addr %s271, 8
        %s273 = scalar_lea.vmem %s1, %s272
        %s274 = smul.u32 2, %s20
      $region36: #{tpu_custom_call.1} parent=27 // pred_fallthru
        _
      // Predicated region
      $region37: #{tpu_custom_call.1} parent=27 // pred_check
        %p275 = pneg %p118
      $region38: #{tpu_custom_call.1} parent=27 // pred_check_branch
        %277 = sbr.rel (%p275) target = $region40
      $region39: #{tpu_custom_call.1} parent=27 // pred_region
        %s278 = sadd.s32 %s20, 1
        %s279 = smul.u32 %s278, 2
        %p280 = scmp.lt.s32.totalorder %s279, 1
        %s281 = scalar_select %p280, %s279, 1
        %p282 = scmp.lt.s32.totalorder %s19, 1
        %s283 = scalar_select %p282, %s19, 1
        %p284 = scmp.lt.s32.totalorder %s281, 1
        %s285 = scalar_select %p284, %s281, 1
        %s286 = smul.addr %s283, 2
        %s287 = sadd.s32 %s285, %s286
        %s288 = smul.addr %s287, 8
        %s289 = scalar_lea.vmem %s2, %s288
        %s290 = sadd.s32 %s20, 1
        %s291 = smul.u32 %s290, 2
        %p292 = scmp.lt.s32.totalorder %s291, 1
        %s293 = scalar_select %p292, %s291, 1
      $region40: #{tpu_custom_call.1} parent=27 // pred_fallthru
        _
    $region28: #{tpu_custom_call.1} parent=5 // pred_fallthru
      _
    %p294 = scmp.le.s32.totalorder 1, %s12
    %p295 = scmp.lt.s32.totalorder %s12, 3
    %p296 = pnand %p294, %p295
    %p297 = pneg %p296
    // Predicated region
    $region41: #{tpu_custom_call.1} parent=5 // pred_check
      _
    $region42: #{tpu_custom_call.1} parent=5 // pred_check_branch
      %299 = sbr.rel (%p296) target = $region44
    $region43: #{tpu_custom_call.1} parent=5 // pred_region
      %s300 = ssub.s32 %s12, 1
      %s301 = smul.u32 %s22, 2
      %s302 = ssub.s32 %s301, 1
      %p303 = scmp.gt.s32.totalorder %s302, 0
      %s304 = scalar_select %p303, %s302, 0
      %p305 = scmp.lt.s32.totalorder %s21, 1
      %s306 = scalar_select %p305, %s21, 1
      %p307 = scmp.lt.s32.totalorder %s304, 1
      %s308 = scalar_select %p307, %s304, 1
      %s309 = smul.addr %s306, 2
      %s310 = sadd.s32 %s308, %s309
      %s311 = smul.addr %s310, 8
      %s312 = scalar_lea.vmem %s0, %s311
      %p313 = pneg %p60
      %p314 = pneg %p57
      %s315 = smul.u32 2, %s22
      %p316 = scmp.lt.s32.totalorder %s21, 1
      %s317 = scalar_select %p316, %s21, 1
      %p318 = scmp.lt.s32.totalorder %s315, 1
      %s319 = scalar_select %p318, %s315, 1
      %s320 = smul.addr %s317, 2
      %s321 = sadd.s32 %s319, %s320
      %s322 = smul.addr %s321, 8
      %s323 = scalar_lea.vmem %s1, %s322
      %p324 = pneg %p88
      %p325 = pneg %p85
      %s326 = sadd.s32 %s22, 1
      %s327 = smul.u32 %s326, 2
      %p328 = scmp.lt.s32.totalorder %s327, 1
      %s329 = scalar_select %p328, %s327, 1
      %p330 = scmp.lt.s32.totalorder %s21, 1
      %s331 = scalar_select %p330, %s21, 1
      %p332 = scmp.lt.s32.totalorder %s329, 1
      %s333 = scalar_select %p332, %s329, 1
      %s334 = smul.addr %s331, 2
      %s335 = sadd.s32 %s333, %s334
      %s336 = smul.addr %s335, 8
      %s337 = scalar_lea.vmem %s2, %s336
      %p338 = pneg %p124
      %p339 = pneg %p121
      %p340 = pneg %p145
      %p341 = pneg %p142
      %p342 = pneg %p166
      %p343 = pneg %p163
      %p344 = pneg %p187
      %p345 = pneg %p184
      %p346 = pneg %p215
      %p347 = pneg %p212
      %s348 = smul.u32 2, %s22
      %p349 = scmp.lt.s32.totalorder %s21, 1
      %s350 = scalar_select %p349, %s21, 1
      %p351 = scmp.lt.s32.totalorder %s348, 1
      %s352 = scalar_select %p351, %s348, 1
      %s353 = smul.addr %s350, 2
      %s354 = sadd.s32 %s352, %s353
      %s355 = smul.addr %s354, 8
      %s356 = scalar_lea.vmem %s6, %s355
      %s357 = smul.u32 %s22, 2
      %s358 = ssub.s32 %s357, 1
      %p359 = scmp.gt.s32.totalorder %s358, 0
      %s360 = scalar_select %p359, %s358, 0
      %p361 = scmp.lt.s32.totalorder %s21, 1
      %s362 = scalar_select %p361, %s21, 1
      %p363 = scmp.lt.s32.totalorder %s360, 1
      %s364 = scalar_select %p363, %s360, 1
      %s365 = smul.addr %s362, 2
      %s366 = sadd.s32 %s364, %s365
      %s367 = smul.addr %s366, 8
      %s368 = scalar_lea.vmem %s0, %s367
      %s369 = smul.u32 %s22, 2
      %s370 = ssub.s32 %s369, 1
      %p371 = scmp.gt.s32.totalorder %s370, 0
      %s372 = scalar_select %p371, %s370, 0
      %s373 = smul.u32 2, %s22
      %p374 = scmp.lt.s32.totalorder %s21, 1
      %s375 = scalar_select %p374, %s21, 1
      %p376 = scmp.lt.s32.totalorder %s373, 1
      %s377 = scalar_select %p376, %s373, 1
      %s378 = smul.addr %s375, 2
      %s379 = sadd.s32 %s377, %s378
      %s380 = smul.addr %s379, 8
      %s381 = scalar_lea.vmem %s1, %s380
      %s382 = smul.u32 2, %s22
      %s383 = sadd.s32 %s22, 1
      %s384 = smul.u32 %s383, 2
      %p385 = scmp.lt.s32.totalorder %s384, 1
      %s386 = scalar_select %p385, %s384, 1
      %p387 = scmp.lt.s32.totalorder %s21, 1
      %s388 = scalar_select %p387, %s21, 1
      %p389 = scmp.lt.s32.totalorder %s386, 1
      %s390 = scalar_select %p389, %s386, 1
      %s391 = smul.addr %s388, 2
      %s392 = sadd.s32 %s390, %s391
      %s393 = smul.addr %s392, 8
      %s394 = scalar_lea.vmem %s2, %s393
      %s395 = sadd.s32 %s22, 1
      %s396 = smul.u32 %s395, 2
      %p397 = scmp.lt.s32.totalorder %s396, 1
      %s398 = scalar_select %p397, %s396, 1
      %s399 = smul.u32 2, %s22
      %p400 = scmp.lt.s32.totalorder %s21, 1
      %s401 = scalar_select %p400, %s21, 1
      %p402 = scmp.lt.s32.totalorder %s399, 1
      %s403 = scalar_select %p402, %s399, 1
      %s404 = smul.addr %s401, 2
      %s405 = sadd.s32 %s403, %s404
      %s406 = smul.addr %s405, 8
      %s407 = scalar_lea.vmem %s6, %s406
      %s408 = smul.u32 2, %s22
      %v409 = vld [vmem:[%s3] sm:$0xf]
      %v410 = vld [vmem:[%s381] sm:$0xff]
      %v411 = vld [vmem:[%s381 + $0x8] sm:$0xff]
      %vm412 = vcmask 31744
      %v414 = vsel %vm412, %v410, 0
      %v417 = vsel %vm412, %v411, 0
      %vm419 = vcmask 1043456
      %v421 = vsel %vm419, %v409, 0
      %423 = vmatprep.subr.mxu0 0.0
      %424 = vmatpush1.msra.mxu0 0.0
      %425 = vmatprep.subr.mxu0 0.0
      %426 = vmatpush1.msra.mxu0 0.0
      %427 = vmatprep.subr.mxu0 0.0
      %428 = vmatpush1.msra.mxu0 0.0
      %429 = vmatprep.subr.mxu0 0.0
      %430 = vmatpush1.msra.mxu0 0.0
      %431 = vmatprep.subr.mxu0 0.0
      %432 = vmatpush1.msra.mxu0 0.0
      %433 = vmatprep.subr.mxu0 0.0
      %434 = vmatpush1.msra.mxu0 0.0
      %435 = vmatprep.subr.mxu0 0.0
      %436 = vmatpush1.msra.mxu0 0.0
      %437 = vmatprep.subr.mxu0 0.0
      %438 = vmatpush1.msra.mxu0 0.0
      %439 = vmatprep.subr.mxu0 0.0
      %440 = vmatpush1.msra.mxu0 0.0
      %441 = vmatprep.subr.mxu0 0.0
      %442 = vmatpush1.msra.mxu0 0.0
      %443 = vmatprep.subr.mxu0 0.0
      %444 = vmatpush1.msra.mxu0 0.0
      %445 = vmatprep.subr.mxu0 0.0
      %446 = vmatpush1.msra.mxu0 0.0
      %447 = vmatprep.subr.mxu0 0.0
      %448 = vmatpush1.msra.mxu0 0.0
      %449 = vmatprep.subr.mxu0 0.0
      %450 = vmatpush1.msra.mxu0 0.0
      %451 = vmatprep.subr.mxu0 0.0
      %452 = vmatpush1.msra.mxu0 0.0
      %453 = vmatprep.subr.mxu0 0.0
      %454 = vmatpush1.msra.mxu0 %v421
      %455 = vmatprep.subr.mxu0 0.0
      %456 = vmatpush2.msra.mxu0 0.0
      %457 = vmatprep.subr.mxu0 0.0
      %458 = vmatpush2.msra.mxu0 0.0
      %459 = vmatprep.subr.mxu0 0.0
      %460 = vmatpush2.msra.mxu0 0.0
      %461 = vmatprep.subr.mxu0 0.0
      %462 = vmatpush2.msra.mxu0 0.0
      %463 = vmatprep.subr.mxu0 0.0
      %464 = vmatpush2.msra.mxu0 0.0
      %465 = vmatprep.subr.mxu0 0.0
      %466 = vmatpush2.msra.mxu0 0.0
      %467 = vmatprep.subr.mxu0 0.0
      %468 = vmatpush2.msra.mxu0 0.0
      %469 = vmatprep.subr.mxu0 0.0
      %470 = vmatpush2.msra.mxu0 0.0
      %471 = vmatprep.subr.mxu0 0.0
      %472 = vmatpush2.msra.mxu0 0.0
      %473 = vmatprep.subr.mxu0 0.0
      %474 = vmatpush2.msra.mxu0 0.0
      %475 = vmatprep.subr.mxu0 0.0
      %476 = vmatpush2.msra.mxu0 0.0
      %477 = vmatprep.subr.mxu0 0.0
      %478 = vmatpush2.msra.mxu0 0.0
      %479 = vmatprep.subr.mxu0 0.0
      %480 = vmatpush2.msra.mxu0 0.0
      %481 = vmatprep.subr.mxu0 0.0
      %482 = vmatpush2.msra.mxu0 0.0
      %483 = vmatprep.subr.mxu0 0.0
      %484 = vmatpush2.msra.mxu0 0.0
      %485 = vmatprep.subr.mxu0 0.0
      %486 = vmatpush2.msra.mxu0 0.0
      %487 = vmatprep.mubr.f32.mxu0 0.0
      %488 = vmatmul.mubr.f32.gmra.mxu0 %v414
      %v489 = vpop.f32.mrf.mxu0
      %v490 = vadd.f32 0.0, %v489
      %v491 = vpop.f32.mrf.mxu0
      %492 = vmatprep.mubr.f32.mxu0 0.0
      %493 = vmatmul.mubr.f32.gmra.mxu0 %v417
      %v494 = vpop.f32.mrf.mxu0
      %v495 = vadd.f32 0.0, %v494
      %v496 = vpop.f32.mrf.mxu0
      %497 = vdwg.mxu0
      %v498 = vld [vmem:[%s368] sm:$0xff]
      %v500 = vsel %vm412, %v498, 0
      %502 = vmatprep.subr.mxu0 0.0
      %503 = vmatpush1.msra.mxu0 0.0
      %504 = vmatprep.subr.mxu0 0.0
      %505 = vmatpush1.msra.mxu0 0.0
      %506 = vmatprep.subr.mxu0 0.0
      %507 = vmatpush1.msra.mxu0 0.0
      %508 = vmatprep.subr.mxu0 0.0
      %509 = vmatpush1.msra.mxu0 0.0
      %510 = vmatprep.subr.mxu0 0.0
      %511 = vmatpush1.msra.mxu0 0.0
      %512 = vmatprep.subr.mxu0 0.0
      %513 = vmatpush1.msra.mxu0 0.0
      %514 = vmatprep.subr.mxu0 0.0
      %515 = vmatpush1.msra.mxu0 0.0
      %516 = vmatprep.subr.mxu0 0.0
      %517 = vmatpush1.msra.mxu0 0.0
      %518 = vmatprep.subr.mxu0 0.0
      %519 = vmatpush1.msra.mxu0 0.0
      %520 = vmatprep.subr.mxu0 0.0
      %521 = vmatpush1.msra.mxu0 0.0
      %522 = vmatprep.subr.mxu0 0.0
      %523 = vmatpush1.msra.mxu0 0.0
      %524 = vmatprep.subr.mxu0 0.0
      %525 = vmatpush1.msra.mxu0 0.0
      %526 = vmatprep.subr.mxu0 0.0
      %527 = vmatpush1.msra.mxu0 0.0
      %528 = vmatprep.subr.mxu0 0.0
      %529 = vmatpush1.msra.mxu0 0.0
      %530 = vmatprep.subr.mxu0 0.0
      %531 = vmatpush1.msra.mxu0 0.0
      %532 = vmatprep.subr.mxu0 0.0
      %533 = vmatpush1.msra.mxu0 %v421
      %534 = vmatprep.subr.mxu0 0.0
      %535 = vmatpush2.msra.mxu0 0.0
      %536 = vmatprep.subr.mxu0 0.0
      %537 = vmatpush2.msra.mxu0 0.0
      %538 = vmatprep.subr.mxu0 0.0
      %539 = vmatpush2.msra.mxu0 0.0
      %540 = vmatprep.subr.mxu0 0.0
      %541 = vmatpush2.msra.mxu0 0.0
      %542 = vmatprep.subr.mxu0 0.0
      %543 = vmatpush2.msra.mxu0 0.0
      %544 = vmatprep.subr.mxu0 0.0
      %545 = vmatpush2.msra.mxu0 0.0
      %546 = vmatprep.subr.mxu0 0.0
      %547 = vmatpush2.msra.mxu0 0.0
      %548 = vmatprep.subr.mxu0 0.0
      %549 = vmatpush2.msra.mxu0 0.0
      %550 = vmatprep.subr.mxu0 0.0
      %551 = vmatpush2.msra.mxu0 0.0
      %552 = vmatprep.subr.mxu0 0.0
      %553 = vmatpush2.msra.mxu0 0.0
      %554 = vmatprep.subr.mxu0 0.0
      %555 = vmatpush2.msra.mxu0 0.0
      %556 = vmatprep.subr.mxu0 0.0
      %557 = vmatpush2.msra.mxu0 0.0
      %558 = vmatprep.subr.mxu0 0.0
      %559 = vmatpush2.msra.mxu0 0.0
      %560 = vmatprep.subr.mxu0 0.0
      %561 = vmatpush2.msra.mxu0 0.0
      %562 = vmatprep.subr.mxu0 0.0
      %563 = vmatpush2.msra.mxu0 0.0
      %564 = vmatprep.subr.mxu0 0.0
      %565 = vmatpush2.msra.mxu0 0.0
      %566 = vmatprep.mubr.f32.mxu0 0.0
      %567 = vmatmul.mubr.f32.gmra.mxu0 %v500
      %v568 = vpop.f32.mrf.mxu0
      %v569 = vadd.f32 0.0, %v568
      %v570 = vpop.f32.mrf.mxu0
      %571 = vdwg.mxu0
      %v572 = vld [vmem:[%s394] sm:$0xff]
      %573 = vrot.lane.b32.xlu0 %v409, 124
      %v574 = vpop.permute.xlu0 %573
      %v576 = vsel %vm412, %v572, 0
      %v578 = vsel %vm419, %v574, 0
      %580 = vmatprep.subr.mxu0 0.0
      %581 = vmatpush1.msra.mxu0 0.0
      %582 = vmatprep.subr.mxu0 0.0
      %583 = vmatpush1.msra.mxu0 0.0
      %584 = vmatprep.subr.mxu0 0.0
      %585 = vmatpush1.msra.mxu0 0.0
      %586 = vmatprep.subr.mxu0 0.0
      %587 = vmatpush1.msra.mxu0 0.0
      %588 = vmatprep.subr.mxu0 0.0
      %589 = vmatpush1.msra.mxu0 0.0
      %590 = vmatprep.subr.mxu0 0.0
      %591 = vmatpush1.msra.mxu0 0.0
      %592 = vmatprep.subr.mxu0 0.0
      %593 = vmatpush1.msra.mxu0 0.0
      %594 = vmatprep.subr.mxu0 0.0
      %595 = vmatpush1.msra.mxu0 0.0
      %596 = vmatprep.subr.mxu0 0.0
      %597 = vmatpush1.msra.mxu0 0.0
      %598 = vmatprep.subr.mxu0 0.0
      %599 = vmatpush1.msra.mxu0 0.0
      %600 = vmatprep.subr.mxu0 0.0
      %601 = vmatpush1.msra.mxu0 0.0
      %602 = vmatprep.subr.mxu0 0.0
      %603 = vmatpush1.msra.mxu0 0.0
      %604 = vmatprep.subr.mxu0 0.0
      %605 = vmatpush1.msra.mxu0 0.0
      %606 = vmatprep.subr.mxu0 0.0
      %607 = vmatpush1.msra.mxu0 0.0
      %608 = vmatprep.subr.mxu0 0.0
      %609 = vmatpush1.msra.mxu0 0.0
      %610 = vmatprep.subr.mxu0 0.0
      %611 = vmatpush1.msra.mxu0 %v578
      %612 = vmatprep.subr.mxu0 0.0
      %613 = vmatpush2.msra.mxu0 0.0
      %614 = vmatprep.subr.mxu0 0.0
      %615 = vmatpush2.msra.mxu0 0.0
      %616 = vmatprep.subr.mxu0 0.0
      %617 = vmatpush2.msra.mxu0 0.0
      %618 = vmatprep.subr.mxu0 0.0
      %619 = vmatpush2.msra.mxu0 0.0
      %620 = vmatprep.subr.mxu0 0.0
      %621 = vmatpush2.msra.mxu0 0.0
      %622 = vmatprep.subr.mxu0 0.0
      %623 = vmatpush2.msra.mxu0 0.0
      %624 = vmatprep.subr.mxu0 0.0
      %625 = vmatpush2.msra.mxu0 0.0
      %626 = vmatprep.subr.mxu0 0.0
      %627 = vmatpush2.msra.mxu0 0.0
      %628 = vmatprep.subr.mxu0 0.0
      %629 = vmatpush2.msra.mxu0 0.0
      %630 = vmatprep.subr.mxu0 0.0
      %631 = vmatpush2.msra.mxu0 0.0
      %632 = vmatprep.subr.mxu0 0.0
      %633 = vmatpush2.msra.mxu0 0.0
      %634 = vmatprep.subr.mxu0 0.0
      %635 = vmatpush2.msra.mxu0 0.0
      %636 = vmatprep.subr.mxu0 0.0
      %637 = vmatpush2.msra.mxu0 0.0
      %638 = vmatprep.subr.mxu0 0.0
      %639 = vmatpush2.msra.mxu0 0.0
      %640 = vmatprep.subr.mxu0 0.0
      %641 = vmatpush2.msra.mxu0 0.0
      %642 = vmatprep.subr.mxu0 0.0
      %643 = vmatpush2.msra.mxu0 0.0
      %644 = vmatprep.mubr.f32.mxu0 0.0
      %645 = vmatmul.mubr.f32.gmra.mxu0 %v576
      %v646 = vpop.f32.mrf.mxu0
      %v647 = vadd.f32 0.0, %v646
      %v648 = vpop.f32.mrf.mxu0
      %649 = vdwg.mxu0
      %vm652 = vcmask 1045504
      %v653 = vrot.slane %v490, 2
      %v654 = vrot.slane %v495, 2
      %v655 = vsel %vm652, %v653, %v654
      %v658 = vrot.slane %v647, 2
      %659 = vrot.lane.b32.xlu0 %v658, 4
      %v660 = vpop.permute.xlu0 %659
      %v662 = vsel %vm652, %v654, %v660
      %v664 = vrot.slane %v569, 6
      %vm666 = vcmask 1041408
      %v667 = vrot.slane %v490, 6
      %v668 = vrot.slane %v495, 6
      %v669 = vsel %vm666, %v667, %v668
      %v672 = vsel %vm666, %v664, %v667
      %v673 = vld [vmem:[%s5] sm:$0x1]
      %v674 = vld [vmem:[%s5 + $0x1] sm:$0x1]
      %v675 = vld [vmem:[%s5 + $0x2] sm:$0x1]
      %s676 = smul.u32 %s22, 16
      %v677 = vlaneseq
      %v678 = vshrl.u32 %v677, 7
      %v679 = vadd.s32 %v678, 8
      %v680 = vstv %s676
      %v681 = vadd.s32 %v680, %v678
      %v682 = vadd.s32 %v680, %v679
      %vm683 = vcmp.lt.s32.totalorder %v681, 14
      %vm684 = vcmp.lt.s32.totalorder %v682, 14
      %686 = vrot.lane.b32.xlu0 %v655, 124
      %v687 = vpop.permute.xlu0 %686
      %688 = vrot.lane.b32.xlu0 %v662, 124
      %v689 = vpop.permute.xlu0 %688
      %v692 = vadd.f32 %v490, %v687
      %v693 = vadd.f32 %v495, %v689
      %v694 = vlaneseq
      %v695 = vshrl.u32 %v694, 7
      %v696 = vsub.s32 0, %v695
      %v697 = vrot.slane %v673, %v696
      %v698 = vadd.f32 %v692, %v697
      %v699 = vadd.f32 %v693, %v697
      %v700 = vmax.f32 %v698, 0.0
      %v701 = vmax.f32 %v699, 0.0
      %v702 = vsel %vm683, 1, 0
      %v703 = vsel %vm684, 1, 0
      %vm704 = vcmp.eq.s32.totalorder %v702, 1
      %vm705 = vcmp.eq.s32.totalorder %v703, 1
      %v706 = vsel %vm704, %v700, 0.0
      %v707 = vsel %vm705, %v701, 0.0
      %vm708 = vcmp.ge.s32.totalorder %v681, 2
      %vm709 = vcmp.ge.s32.totalorder %v682, 2
      %710 = vrot.lane.b32.xlu0 %v490, 124
      %v711 = vpop.permute.xlu0 %710
      %712 = vrot.lane.b32.xlu0 %v495, 124
      %v713 = vpop.permute.xlu0 %712
      %v716 = vadd.f32 %v672, %v711
      %v717 = vadd.f32 %v669, %v713
      %v718 = vadd.f32 %v716, %v697
      %v719 = vadd.f32 %v717, %v697
      %v720 = vmax.f32 %v718, 0.0
      %v721 = vmax.f32 %v719, 0.0
      %v722 = vsel %vm708, 1, 0
      %v723 = vsel %vm709, 1, 0
      %vm724 = vcmp.eq.s32.totalorder %v722, 1
      %vm725 = vcmp.eq.s32.totalorder %v723, 1
      %v726 = vsel %vm724, %v720, 0.0
      %v727 = vsel %vm725, %v721, 0.0
      %v728 = vld [vmem:[%s4] sm:$0xf]
      %s729 = scalar_lea.vmem %s4, 4
      %v730 = vld [vmem:[%s729] sm:$0xf]
      %v732 = vsel %vm412, %v706, 0
      %v735 = vsel %vm412, %v707, 0
      %v738 = vsel %vm419, %v730, 0
      %740 = vmatprep.subr.mxu0 0.0
      %741 = vmatpush1.msra.mxu0 0.0
      %742 = vmatprep.subr.mxu0 0.0
      %743 = vmatpush1.msra.mxu0 0.0
      %744 = vmatprep.subr.mxu0 0.0
      %745 = vmatpush1.msra.mxu0 0.0
      %746 = vmatprep.subr.mxu0 0.0
      %747 = vmatpush1.msra.mxu0 0.0
      %748 = vmatprep.subr.mxu0 0.0
      %749 = vmatpush1.msra.mxu0 0.0
      %750 = vmatprep.subr.mxu0 0.0
      %751 = vmatpush1.msra.mxu0 0.0
      %752 = vmatprep.subr.mxu0 0.0
      %753 = vmatpush1.msra.mxu0 0.0
      %754 = vmatprep.subr.mxu0 0.0
      %755 = vmatpush1.msra.mxu0 0.0
      %756 = vmatprep.subr.mxu0 0.0
      %757 = vmatpush1.msra.mxu0 0.0
      %758 = vmatprep.subr.mxu0 0.0
      %759 = vmatpush1.msra.mxu0 0.0
      %760 = vmatprep.subr.mxu0 0.0
      %761 = vmatpush1.msra.mxu0 0.0
      %762 = vmatprep.subr.mxu0 0.0
      %763 = vmatpush1.msra.mxu0 0.0
      %764 = vmatprep.subr.mxu0 0.0
      %765 = vmatpush1.msra.mxu0 0.0
      %766 = vmatprep.subr.mxu0 0.0
      %767 = vmatpush1.msra.mxu0 0.0
      %768 = vmatprep.subr.mxu0 0.0
      %769 = vmatpush1.msra.mxu0 0.0
      %770 = vmatprep.subr.mxu0 0.0
      %771 = vmatpush1.msra.mxu0 %v738
      %772 = vmatprep.subr.mxu0 0.0
      %773 = vmatpush2.msra.mxu0 0.0
      %774 = vmatprep.subr.mxu0 0.0
      %775 = vmatpush2.msra.mxu0 0.0
      %776 = vmatprep.subr.mxu0 0.0
      %777 = vmatpush2.msra.mxu0 0.0
      %778 = vmatprep.subr.mxu0 0.0
      %779 = vmatpush2.msra.mxu0 0.0
      %780 = vmatprep.subr.mxu0 0.0
      %781 = vmatpush2.msra.mxu0 0.0
      %782 = vmatprep.subr.mxu0 0.0
      %783 = vmatpush2.msra.mxu0 0.0
      %784 = vmatprep.subr.mxu0 0.0
      %785 = vmatpush2.msra.mxu0 0.0
      %786 = vmatprep.subr.mxu0 0.0
      %787 = vmatpush2.msra.mxu0 0.0
      %788 = vmatprep.subr.mxu0 0.0
      %789 = vmatpush2.msra.mxu0 0.0
      %790 = vmatprep.subr.mxu0 0.0
      %791 = vmatpush2.msra.mxu0 0.0
      %792 = vmatprep.subr.mxu0 0.0
      %793 = vmatpush2.msra.mxu0 0.0
      %794 = vmatprep.subr.mxu0 0.0
      %795 = vmatpush2.msra.mxu0 0.0
      %796 = vmatprep.subr.mxu0 0.0
      %797 = vmatpush2.msra.mxu0 0.0
      %798 = vmatprep.subr.mxu0 0.0
      %799 = vmatpush2.msra.mxu0 0.0
      %800 = vmatprep.subr.mxu0 0.0
      %801 = vmatpush2.msra.mxu0 0.0
      %802 = vmatprep.subr.mxu0 0.0
      %803 = vmatpush2.msra.mxu0 0.0
      %804 = vmatprep.mubr.f32.mxu0 0.0
      %805 = vmatmul.mubr.f32.gmra.mxu0 %v732
      %v806 = vpop.f32.mrf.mxu0
      %v807 = vadd.f32 0.0, %v806
      %v808 = vpop.f32.mrf.mxu0
      %809 = vmatprep.mubr.f32.mxu0 0.0
      %810 = vmatmul.mubr.f32.gmra.mxu0 %v735
      %v811 = vpop.f32.mrf.mxu0
      %v812 = vadd.f32 0.0, %v811
      %v813 = vpop.f32.mrf.mxu0
      %814 = vdwg.mxu0
      %v816 = vsel %vm412, %v726, 0
      %v819 = vsel %vm412, %v727, 0
      %v822 = vsel %vm419, %v728, 0
      %824 = vmatprep.subr.mxu0 0.0
      %825 = vmatpush1.msra.mxu0 0.0
      %826 = vmatprep.subr.mxu0 0.0
      %827 = vmatpush1.msra.mxu0 0.0
      %828 = vmatprep.subr.mxu0 0.0
      %829 = vmatpush1.msra.mxu0 0.0
      %830 = vmatprep.subr.mxu0 0.0
      %831 = vmatpush1.msra.mxu0 0.0
      %832 = vmatprep.subr.mxu0 0.0
      %833 = vmatpush1.msra.mxu0 0.0
      %834 = vmatprep.subr.mxu0 0.0
      %835 = vmatpush1.msra.mxu0 0.0
      %836 = vmatprep.subr.mxu0 0.0
      %837 = vmatpush1.msra.mxu0 0.0
      %838 = vmatprep.subr.mxu0 0.0
      %839 = vmatpush1.msra.mxu0 0.0
      %840 = vmatprep.subr.mxu0 0.0
      %841 = vmatpush1.msra.mxu0 0.0
      %842 = vmatprep.subr.mxu0 0.0
      %843 = vmatpush1.msra.mxu0 0.0
      %844 = vmatprep.subr.mxu0 0.0
      %845 = vmatpush1.msra.mxu0 0.0
      %846 = vmatprep.subr.mxu0 0.0
      %847 = vmatpush1.msra.mxu0 0.0
      %848 = vmatprep.subr.mxu0 0.0
      %849 = vmatpush1.msra.mxu0 0.0
      %850 = vmatprep.subr.mxu0 0.0
      %851 = vmatpush1.msra.mxu0 0.0
      %852 = vmatprep.subr.mxu0 0.0
      %853 = vmatpush1.msra.mxu0 0.0
      %854 = vmatprep.subr.mxu0 0.0
      %855 = vmatpush1.msra.mxu0 %v822
      %856 = vmatprep.subr.mxu0 0.0
      %857 = vmatpush2.msra.mxu0 0.0
      %858 = vmatprep.subr.mxu0 0.0
      %859 = vmatpush2.msra.mxu0 0.0
      %860 = vmatprep.subr.mxu0 0.0
      %861 = vmatpush2.msra.mxu0 0.0
      %862 = vmatprep.subr.mxu0 0.0
      %863 = vmatpush2.msra.mxu0 0.0
      %864 = vmatprep.subr.mxu0 0.0
      %865 = vmatpush2.msra.mxu0 0.0
      %866 = vmatprep.subr.mxu0 0.0
      %867 = vmatpush2.msra.mxu0 0.0
      %868 = vmatprep.subr.mxu0 0.0
      %869 = vmatpush2.msra.mxu0 0.0
      %870 = vmatprep.subr.mxu0 0.0
      %871 = vmatpush2.msra.mxu0 0.0
      %872 = vmatprep.subr.mxu0 0.0
      %873 = vmatpush2.msra.mxu0 0.0
      %874 = vmatprep.subr.mxu0 0.0
      %875 = vmatpush2.msra.mxu0 0.0
      %876 = vmatprep.subr.mxu0 0.0
      %877 = vmatpush2.msra.mxu0 0.0
      %878 = vmatprep.subr.mxu0 0.0
      %879 = vmatpush2.msra.mxu0 0.0
      %880 = vmatprep.subr.mxu0 0.0
      %881 = vmatpush2.msra.mxu0 0.0
      %882 = vmatprep.subr.mxu0 0.0
      %883 = vmatpush2.msra.mxu0 0.0
      %884 = vmatprep.subr.mxu0 0.0
      %885 = vmatpush2.msra.mxu0 0.0
      %886 = vmatprep.subr.mxu0 0.0
      %887 = vmatpush2.msra.mxu0 0.0
      %888 = vmatprep.mubr.f32.mxu0 0.0
      %889 = vmatmul.mubr.f32.gmra.mxu0 %v816
      %v890 = vpop.f32.mrf.mxu0
      %v891 = vadd.f32 %v807, %v890
      %v892 = vpop.f32.mrf.mxu0
      %893 = vmatprep.mubr.f32.mxu0 0.0
      %894 = vmatmul.mubr.f32.gmra.mxu0 %v819
      %v895 = vpop.f32.mrf.mxu0
      %v896 = vadd.f32 %v812, %v895
      %v897 = vpop.f32.mrf.mxu0
      %898 = vdwg.mxu0
      %v899 = vlaneseq
      %v900 = vshrl.u32 %v899, 7
      %v901 = vsub.s32 0, %v900
      %v902 = vrot.slane %v674, %v901
      %v903 = vadd.f32 %v891, %v902
      %v904 = vadd.f32 %v896, %v902
      %v905 = vmax.f32 %v903, 0.0
      %v906 = vmax.f32 %v904, 0.0
      %907 = vrot.lane.b32.xlu0 %v490, 120
      %v908 = vpop.permute.xlu0 %907
      %909 = vrot.lane.b32.xlu0 %v495, 120
      %v910 = vpop.permute.xlu0 %909
      %v913 = vadd.f32 %v905, %v908
      %v914 = vadd.f32 %v906, %v910
      %v915 = vlaneseq
      %v916 = vshrl.u32 %v915, 7
      %v917 = vsub.s32 0, %v916
      %v918 = vrot.slane %v675, %v917
      %v919 = vadd.f32 %v913, %v918
      %v920 = vadd.f32 %v914, %v918
      %921 = vst.msk [vmem:[%s407] sm:$0xff] %vm412, %v919
      %922 = vst.msk [vmem:[%s407 + $0x8] sm:$0xff] %vm412, %v920
      %s923 = smul.u32 2, %s22
      %p924 = scmp.lt.s32.totalorder %s21, 1
      %s925 = scalar_select %p924, %s21, 1
      %p926 = scmp.lt.s32.totalorder %s923, 1
      %s927 = scalar_select %p926, %s923, 1
      %s928 = smul.addr %s925, 2
      %s929 = sadd.s32 %s927, %s928
      %s930 = smul.addr %s929, 8
      %s931 = scalar_lea.vmem %s6, %s930
      // Predicated region
      $region45: #{tpu_custom_call.1} parent=43 // pred_check
        %p932 = pneg %p212
      $region46: #{tpu_custom_call.1} parent=43 // pred_check_branch
        %934 = sbr.rel (%p932) target = $region48
      $region47: #{tpu_custom_call.1} parent=43 // pred_region
        %s935 = smul.u32 2, %s22
      $region48: #{tpu_custom_call.1} parent=43 // pred_fallthru
        _
    $region44: #{tpu_custom_call.1} parent=5 // pred_fallthru
      _
    %p936 = scmp.le.s32.totalorder 2, %s12
    // Predicated region
    $region49: #{tpu_custom_call.1} parent=5 // pred_check
      %p937 = pneg %p936
    $region50: #{tpu_custom_call.1} parent=5 // pred_check_branch
      %939 = sbr.rel (%p937) target = $region52
    $region51: #{tpu_custom_call.1} parent=5 // pred_region
      %s940 = ssub.s32 %s12, 2
      // Predicated region
      $region53: #{tpu_custom_call.1} parent=51 // pred_check
        %p941 = pneg %p218
      $region54: #{tpu_custom_call.1} parent=51 // pred_check_branch
        %943 = sbr.rel (%p941) target = $region56
      $region55: #{tpu_custom_call.1} parent=51 // pred_region
        %s944 = smul.u32 2, %s24
        %p945 = scmp.lt.s32.totalorder %s23, 1
        %s946 = scalar_select %p945, %s23, 1
        %p947 = scmp.lt.s32.totalorder %s944, 1
        %s948 = scalar_select %p947, %s944, 1
        %s949 = smul.addr %s946, 2
        %s950 = sadd.s32 %s948, %s949
        %s951 = smul.addr %s950, 8
        %s952 = scalar_lea.vmem %s6, %s951
      $region56: #{tpu_custom_call.1} parent=51 // pred_fallthru
        _
    $region52: #{tpu_custom_call.1} parent=5 // pred_fallthru
      _
  $region6: #{tpu_custom_call.1} parent=0 // loop_footer
    %s16 = sadd.s32 1, %s12
  $region7: #{tpu_custom_call.1} parent=0 // loop_footer_branch
    %11 = sbr.rel target = $region3
  $region8: #{tpu_custom_call.1} parent=0 // loop_exit
    _

</llo_original>
